<compile_context>
chip_gen: v5e
topology: v5e:2x2
jax: 0.10.0
libtpu: 0.0.40
codegen_flags: <defaults>
</compile_context>

<pallas_src>
import functools

import jax
import jax.numpy as jnp
from jax import lax
from jax.experimental import pallas as pl
from jax.experimental.pallas import tpu as pltpu

HIDDEN = 20
IN_F = 2
OUT_F = 1
LANE = 128          # vreg lane width; batch tiles are multiples of this


def _default_compute_dtype():
    """bf16 activations only on chips with bf16 EUP/VPU (v6e / v7x); f32 otherwise."""
    try:
        kind = jax.devices()[0].device_kind.lower()
    except Exception:
        return jnp.float32
    if ("v6" in kind) or ("v7" in kind) or ("7x" in kind):
        return jnp.bfloat16
    return jnp.float32


def _pick_chunk(tile):
    """Largest lane chunk (<=256) dividing the tile (tile is a multiple of 128).

    256 lanes keeps the f32 live set (h, fresh matmul result, hoisted bias
    broadcasts) comfortably under the 64-vreg file; the per-chunk loop overhead
    is negligible next to ~100 tanh per point.
    """
    for c in (256, 128):
        if tile % c == 0:
            return c
    return tile


def mlp_kernel(x_ref, w_in_ref, b_in_ref, w_h_ref, b_h_ref,
               w_out_ref, b_out_ref, o_ref, *, chunk, compute_dtype):
    """Full forward pass for one tile of batch columns (feature-major).

    x_ref:     (2, TILE)  VMEM   (t, x) rows on sublanes, batch on lanes
    w_in_ref:  (20, 2)    VMEM   PyTorch-native (out, in) weight
    b_in_ref:  (20, 1)    VMEM
    w_h_ref:   (20, 20)   VMEM   shared hidden layer, applied 4x
    b_h_ref:   (20, 1)    VMEM
    w_out_ref: (1, 20)    VMEM
    b_out_ref: (1, 1)     VMEM
    o_ref:     (1, TILE)  VMEM   lane-dense output tile
    """
    tile = x_ref.shape[1]
    n_chunks = tile // chunk

    # Hoist weight loads/casts and bias broadcasts out of the chunk loop
    # (JAX does not CSE broadcast_in_dim).
    w_in = w_in_ref[...]                                          # f32 (20, 2)
    w_h = w_h_ref[...].astype(compute_dtype)                      # (20, 20)
    w_out = w_out_ref[...].astype(compute_dtype)                  # (1, 20)
    b_in_b = jnp.broadcast_to(b_in_ref[...], (HIDDEN, chunk))     # f32
    b_h_b = jnp.broadcast_to(b_h_ref[...].astype(compute_dtype),
                             (HIDDEN, chunk))
    b_out_b = jnp.broadcast_to(b_out_ref[...], (OUT_F, chunk))    # f32

    def body(j, carry):
        off = pl.multiple_of(j * chunk, chunk)
        xs = x_ref[:, pl.ds(off, chunk)]                          # (2, chunk) f32

        # input layer stays f32 (preserves (t, x) coordinate precision);
        # activation emitted in compute_dtype so the hidden tanh chain runs on
        # the bf16 EUP path where available (v6e / v7x).
        h = jnp.tanh(
            jnp.dot(w_in, xs, preferred_element_type=jnp.float32) + b_in_b
        ).astype(compute_dtype)

        # the SAME hidden layer applied 4 times (matches self.hidden reuse)
        for _ in range(4):
            acc = jnp.dot(w_h, h, preferred_element_type=jnp.float32)
            h = jnp.tanh(acc.astype(compute_dtype) + b_h_b)

        # output layer (no activation), accumulated and stored in f32
        out = (jnp.dot(w_out, h, preferred_element_type=jnp.float32)
               + b_out_b)
        o_ref[:, pl.ds(off, chunk)] = out.astype(o_ref.dtype)
        return carry

    lax.fori_loop(0, n_chunks, body, 0)


def net_forward(x, params, *, tm=8192, compute_dtype=None):
    """x: (N, 2) float32. params: PyTorch-layout weights/biases (see init_params).

    tm: target batch-lane tile per grid step (sweepable, 2048-8192 recommended).
    N is padded only up to a multiple of 128 lanes; the actual tile is derived
    so the grid keeps >= 2 steps (both v7x TensorCores busy) when possible.
    compute_dtype: None -> bf16 on v6e/v7x, f32 elsewhere.
    """
    n = x.shape[0]
    if compute_dtype is None:
        compute_dtype = _default_compute_dtype()
    tm = max(int(tm), LANE)

    # --- tiling: pad only to the 128-lane width, then split into grid steps ---
    n_lanes = pl.cdiv(n, LANE)                       # 128-lane groups of points
    min_steps = 2 if n_lanes >= 2 else 1             # keep both v7x TCs busy
    num_steps = max(pl.cdiv(n_lanes * LANE, tm), min_steps)
    tile = pl.cdiv(n_lanes, num_steps) * LANE        # per-step batch tile
    n_pad = num_steps * tile                         # total waste < num_steps*128
    chunk = _pick_chunk(tile)

    # feature-major, lane-dense input: (2, n_pad)
    # TODO(synk): producers can supply collocation points already as (2, N)
    # feature-major to skip this transpose+pad round-trip (pure HBM overhead).
    x_fm = jnp.pad(x.astype(jnp.float32).T, ((0, 0), (0, n_pad - n)))

    w_in, b_in = params["w_in"], params["b_in"]
    w_h, b_h = params["w_h"], params["b_h"]
    w_out, b_out = params["w_out"], params["b_out"]

    full = lambda shape: pl.BlockSpec(shape, lambda i: (0, 0))

    flops = 2 * n_pad * (IN_F * HIDDEN + 4 * HIDDEN * HIDDEN + HIDDEN * OUT_F)
    transcendentals = 5 * HIDDEN * n_pad
    bytes_accessed = 4 * (n_pad * (IN_F + OUT_F)
                          + IN_F * HIDDEN + HIDDEN * HIDDEN
                          + HIDDEN * OUT_F + 2 * HIDDEN + OUT_F)

    kernel = functools.partial(mlp_kernel, chunk=chunk,
                               compute_dtype=compute_dtype)

    out_fm = pl.pallas_call(
        kernel,
        out_shape=jax.ShapeDtypeStruct((OUT_F, n_pad), jnp.float32),
        grid_spec=pltpu.PrefetchScalarGridSpec(
            num_scalar_prefetch=0,
            grid=(num_steps,),
            in_specs=[
                pl.BlockSpec((IN_F, tile), lambda i: (0, i)),   # x tile (2, tile)
                full((HIDDEN, IN_F)),                            # w_in
                full((HIDDEN, 1)),                               # b_in
                full((HIDDEN, HIDDEN)),                          # w_h
                full((HIDDEN, 1)),                               # b_h
                full((OUT_F, HIDDEN)),                           # w_out
                full((OUT_F, 1)),                                # b_out
            ],
            out_specs=pl.BlockSpec((OUT_F, tile), lambda i: (0, i)),
        ),
        compiler_params=pltpu.CompilerParams(
            dimension_semantics=("parallel",)),
        cost_estimate=pl.CostEstimate(
            flops=flops, transcendentals=transcendentals,
            bytes_accessed=bytes_accessed),
    )(x_fm, w_in, b_in, w_h, b_h, w_out, b_out)

    # back to (N, 1) row-major, dropping the pad columns
    return out_fm[:, :n].T


def init_params(key):
    """Deterministic init mimicking nn.Linear's U(-1/sqrt(fan_in), +1/sqrt(fan_in)).

    Weights in PyTorch-native layout (out_features, in_features); biases as
    (out_features, 1) for lane-broadcast inside the kernel.
    """
    ks = jax.random.split(key, 6)

    def linear(kw, kb, fan_in, fan_out):
        bound = 1.0 / jnp.sqrt(jnp.float32(fan_in))
        w = jax.random.uniform(kw, (fan_out, fan_in), jnp.float32,
                               minval=-bound, maxval=bound)
        b = jax.random.uniform(kb, (fan_out, 1), jnp.float32,
                               minval=-bound, maxval=bound)
        return w, b

    w_in, b_in = linear(ks[0], ks[1], IN_F, HIDDEN)
    w_h, b_h = linear(ks[2], ks[3], HIDDEN, HIDDEN)
    w_out, b_out = linear(ks[4], ks[5], HIDDEN, OUT_F)
    return dict(w_in=w_in, b_in=b_in, w_h=w_h, b_h=b_h,
                w_out=w_out, b_out=b_out)


def net_forward_ref(x, p):
    """Pure-JAX reference (row-major, nn.Linear convention) for correctness."""
    h = jnp.tanh(x @ p["w_in"].T + p["b_in"].T)
    for _ in range(4):
        h = jnp.tanh(h @ p["w_h"].T + p["b_h"].T)
    return h @ p["w_out"].T + p["b_out"].T


if __name__ == "__main__":
    key = jax.random.PRNGKey(0)
    k_param, k_x1, k_x2 = jax.random.split(key, 3)

    params = init_params(k_param)

    # 1) small batch, explicit f32 compute: must match the nn.Linear reference
    #    tightly.  N=256 -> no pad waste, 2 grid steps of 128 lanes.
    n1 = 256
    x1 = jax.random.uniform(k_x1, (n1, IN_F), jnp.float32)
    out1 = jax.block_until_ready(
        net_forward(x1, params, compute_dtype=jnp.float32))
    ref1 = net_forward_ref(x1, params)
    assert out1.shape == (n1, OUT_F)
    assert jnp.allclose(out1, ref1, atol=1e-5, rtol=1e-5)

    # 2) odd-sized batch, chip-default compute dtype (bf16 on v6e/v7x, f32 on
    #    v5e): exercises the minimal lane padding (1000 -> 1024), derived tile
    #    (512), and the chunked inner loop.  Tolerance covers bf16 activations.
    n2 = 1000
    x2 = jax.random.uniform(k_x2, (n2, IN_F), jnp.float32)
    out2 = jax.block_until_ready(net_forward(x2, params, tm=512))
    ref2 = net_forward_ref(x2, params)
    assert out2.shape == (n2, OUT_F)
    assert jnp.allclose(out2, ref2, atol=5e-2, rtol=5e-2)

    print("KERNEL_OK")
</pallas_src>

<mosaic_0001>
module attributes {stable_mosaic.version = 11 : i64} {
  func.func @mlp_kernel(%arg0: i32, %arg1: memref<2x128xf32, #tpu.memory_space<vmem>>, %arg2: memref<20x2xf32, #tpu.memory_space<vmem>>, %arg3: memref<20x1xf32, #tpu.memory_space<vmem>>, %arg4: memref<20x20xf32, #tpu.memory_space<vmem>>, %arg5: memref<20x1xf32, #tpu.memory_space<vmem>>, %arg6: memref<1x20xf32, #tpu.memory_space<vmem>>, %arg7: memref<1x1xf32, #tpu.memory_space<vmem>>, %arg8: memref<1x128xf32, #tpu.memory_space<vmem>>) attributes {dimension_semantics = [#tpu.dimension_semantics<parallel>], iteration_bounds = array<i64: 2>, scalar_prefetch = 0 : i64, scratch_operands = 0 : i64, tpu.core_type = #tpu.core_type<tc>, window_params = [{transform_indices = @transform_0, window_bounds = array<i64: 2, 128>}, {pipeline_mode = #tpu.pipeline_mode<synchronous>, transform_indices = @transform_1, window_bounds = array<i64: 20, 2>}, {pipeline_mode = #tpu.pipeline_mode<synchronous>, transform_indices = @transform_2, window_bounds = array<i64: 20, 1>}, {pipeline_mode = #tpu.pipeline_mode<synchronous>, transform_indices = @transform_3, window_bounds = array<i64: 20, 20>}, {pipeline_mode = #tpu.pipeline_mode<synchronous>, transform_indices = @transform_4, window_bounds = array<i64: 20, 1>}, {pipeline_mode = #tpu.pipeline_mode<synchronous>, transform_indices = @transform_5, window_bounds = array<i64: 1, 20>}, {pipeline_mode = #tpu.pipeline_mode<synchronous>, transform_indices = @transform_6, window_bounds = array<i64: 1, 1>}, {transform_indices = @transform_7, window_bounds = array<i64: 1, 128>}]} {
    %c0 = arith.constant 0 : index
    %c0_0 = arith.constant 0 : index
    %0 = vector.load %arg2[%c0, %c0_0] : memref<20x2xf32, #tpu.memory_space<vmem>>, vector<20x2xf32>
    %c0_1 = arith.constant 0 : index
    %c0_2 = arith.constant 0 : index
    %1 = vector.load %arg4[%c0_1, %c0_2] : memref<20x20xf32, #tpu.memory_space<vmem>>, vector<20x20xf32>
    %c0_3 = arith.constant 0 : index
    %c0_4 = arith.constant 0 : index
    %2 = vector.load %arg6[%c0_3, %c0_4] : memref<1x20xf32, #tpu.memory_space<vmem>>, vector<1x20xf32>
    %c0_5 = arith.constant 0 : index
    %c0_6 = arith.constant 0 : index
    %3 = vector.load %arg3[%c0_5, %c0_6] : memref<20x1xf32, #tpu.memory_space<vmem>>, vector<20x1xf32>
    %4 = vector.shape_cast %3 : vector<20x1xf32> to vector<20x1xf32>
    %5 = vector.broadcast %4 : vector<20x1xf32> to vector<20x128xf32>
    %c0_7 = arith.constant 0 : index
    %c0_8 = arith.constant 0 : index
    %6 = vector.load %arg5[%c0_7, %c0_8] : memref<20x1xf32, #tpu.memory_space<vmem>>, vector<20x1xf32>
    %7 = vector.shape_cast %6 : vector<20x1xf32> to vector<20x1xf32>
    %8 = vector.broadcast %7 : vector<20x1xf32> to vector<20x128xf32>
    %c0_9 = arith.constant 0 : index
    %c0_10 = arith.constant 0 : index
    %9 = vector.load %arg7[%c0_9, %c0_10] : memref<1x1xf32, #tpu.memory_space<vmem>>, vector<1x1xf32>
    %10 = vector.shape_cast %9 : vector<1x1xf32> to vector<1x1xf32>
    %11 = vector.broadcast %10 : vector<1x1xf32> to vector<1x128xf32>
    %c0_i32 = arith.constant 0 : i32
    %c128_i32 = arith.constant 128 : i32
    %12 = arith.muli %c0_i32, %c128_i32 : i32
    %13 = tpu.assume_multiple %12, 128 : i32
    %c0_11 = arith.constant 0 : index
    %14 = arith.index_cast %13 : i32 to index
    %15 = vector.load %arg1[%c0_11, %14] : memref<2x128xf32, #tpu.memory_space<vmem>>, vector<2x128xf32>
    %cst = arith.constant dense<0.000000e+00> : vector<20x128xf32>
    %16 = tpu.matmul %0, %15, %cst {dimension_numbers = #tpu.dot_dimension_numbers<[1], [0], [0], [1], [0, 0, 1, 1], [], []>} : vector<20x2xf32>, vector<2x128xf32>, vector<20x128xf32> -> vector<20x128xf32>
    %17 = arith.addf %16, %5 : vector<20x128xf32>
    %18 = math.tanh %17 : vector<20x128xf32>
    %cst_12 = arith.constant dense<0.000000e+00> : vector<20x128xf32>
    %19 = tpu.matmul %1, %18, %cst_12 {dimension_numbers = #tpu.dot_dimension_numbers<[1], [0], [0], [1], [0, 0, 1, 1], [], []>} : vector<20x20xf32>, vector<20x128xf32>, vector<20x128xf32> -> vector<20x128xf32>
    %20 = arith.addf %19, %8 : vector<20x128xf32>
    %21 = math.tanh %20 : vector<20x128xf32>
    %cst_13 = arith.constant dense<0.000000e+00> : vector<20x128xf32>
    %22 = tpu.matmul %1, %21, %cst_13 {dimension_numbers = #tpu.dot_dimension_numbers<[1], [0], [0], [1], [0, 0, 1, 1], [], []>} : vector<20x20xf32>, vector<20x128xf32>, vector<20x128xf32> -> vector<20x128xf32>
    %23 = arith.addf %22, %8 : vector<20x128xf32>
    %24 = math.tanh %23 : vector<20x128xf32>
    %cst_14 = arith.constant dense<0.000000e+00> : vector<20x128xf32>
    %25 = tpu.matmul %1, %24, %cst_14 {dimension_numbers = #tpu.dot_dimension_numbers<[1], [0], [0], [1], [0, 0, 1, 1], [], []>} : vector<20x20xf32>, vector<20x128xf32>, vector<20x128xf32> -> vector<20x128xf32>
    %26 = arith.addf %25, %8 : vector<20x128xf32>
    %27 = math.tanh %26 : vector<20x128xf32>
    %cst_15 = arith.constant dense<0.000000e+00> : vector<20x128xf32>
    %28 = tpu.matmul %1, %27, %cst_15 {dimension_numbers = #tpu.dot_dimension_numbers<[1], [0], [0], [1], [0, 0, 1, 1], [], []>} : vector<20x20xf32>, vector<20x128xf32>, vector<20x128xf32> -> vector<20x128xf32>
    %29 = arith.addf %28, %8 : vector<20x128xf32>
    %30 = math.tanh %29 : vector<20x128xf32>
    %cst_16 = arith.constant dense<0.000000e+00> : vector<1x128xf32>
    %31 = tpu.matmul %2, %30, %cst_16 {dimension_numbers = #tpu.dot_dimension_numbers<[1], [0], [0], [1], [0, 0, 1, 1], [], []>} : vector<1x20xf32>, vector<20x128xf32>, vector<1x128xf32> -> vector<1x128xf32>
    %32 = arith.addf %31, %11 : vector<1x128xf32>
    %c0_17 = arith.constant 0 : index
    %33 = arith.index_cast %13 : i32 to index
    %34 = vector.load %arg8[%c0_17, %33] : memref<1x128xf32, #tpu.memory_space<vmem>>, vector<1x128xf32>
    tpu.vector_store %arg8[%c0_17, %33], %32 {strides = array<i32>} : memref<1x128xf32, #tpu.memory_space<vmem>>, vector<1x128xf32>,
    %c1_i32 = arith.constant 1 : i32
    return
  }
  func.func @transform_0(%arg0: i32) -> (i32, i32) {
    %c0_i32 = arith.constant 0 : i32
    %c0_i32_0 = arith.constant 0 : i32
    return %c0_i32, %arg0 : i32, i32
  }
  func.func @transform_1(%arg0: i32) -> (i32, i32) {
    %c0_i32 = arith.constant 0 : i32
    %c0_i32_0 = arith.constant 0 : i32
    %c0_i32_1 = arith.constant 0 : i32
    return %c0_i32, %c0_i32_0 : i32, i32
  }
  func.func @transform_2(%arg0: i32) -> (i32, i32) {
    %c0_i32 = arith.constant 0 : i32
    %c0_i32_0 = arith.constant 0 : i32
    %c0_i32_1 = arith.constant 0 : i32
    return %c0_i32, %c0_i32_0 : i32, i32
  }
  func.func @transform_3(%arg0: i32) -> (i32, i32) {
    %c0_i32 = arith.constant 0 : i32
    %c0_i32_0 = arith.constant 0 : i32
    %c0_i32_1 = arith.constant 0 : i32
    return %c0_i32, %c0_i32_0 : i32, i32
  }
  func.func @transform_4(%arg0: i32) -> (i32, i32) {
    %c0_i32 = arith.constant 0 : i32
    %c0_i32_0 = arith.constant 0 : i32
    %c0_i32_1 = arith.constant 0 : i32
    return %c0_i32, %c0_i32_0 : i32, i32
  }
  func.func @transform_5(%arg0: i32) -> (i32, i32) {
    %c0_i32 = arith.constant 0 : i32
    %c0_i32_0 = arith.constant 0 : i32
    %c0_i32_1 = arith.constant 0 : i32
    return %c0_i32, %c0_i32_0 : i32, i32
  }
  func.func @transform_6(%arg0: i32) -> (i32, i32) {
    %c0_i32 = arith.constant 0 : i32
    %c0_i32_0 = arith.constant 0 : i32
    %c0_i32_1 = arith.constant 0 : i32
    return %c0_i32, %c0_i32_0 : i32, i32
  }
  func.func @transform_7(%arg0: i32) -> (i32, i32) {
    %c0_i32 = arith.constant 0 : i32
    %c0_i32_0 = arith.constant 0 : i32
    return %c0_i32, %arg0 : i32, i32
  }
}

</mosaic_0001>

<llo_original>
// kernel: tpu_custom_call.1
$region0: #{tpu_custom_call.1}
  #allocation0 [shape = 'u32[]', space=smem, size = 0x4, offset = 0x4, fixed_abs, tag = 'smem constant byte address 0x4 - core index']
  #allocation1 [shape = 'u32[72,128]{1,0:T(1,128)}', space=vmem, size = 0x9000, scoped, tag = 'internal scratch']
  #allocation2 [shape = 'f32[1,1]{1,0:T(1,128)S(1)}', space=vmem, size = 0x200, scoped, tag = 'scoped memory for tpu_custom_call.1']
  %s0 = inlined_call_operand.vmem [shape: f32[2,256], index: 0, kind: input, shape index: {}]
  %s1 = inlined_call_operand.vmem [shape: f32[20,2], index: 1, kind: input, shape index: {}]
  %s2 = inlined_call_operand.vmem [shape: f32[20,1], index: 2, kind: input, shape index: {}]
  %s3 = inlined_call_operand.vmem [shape: f32[20,20], index: 3, kind: input, shape index: {}]
  %s4 = inlined_call_operand.vmem [shape: f32[20,1], index: 4, kind: input, shape index: {}]
  %s5 = inlined_call_operand.vmem [shape: f32[1,20], index: 5, kind: input, shape index: {}]
  %s6 = inlined_call_operand.<no memory space> [shape: f32[1,1], index: 6, kind: input, shape index: {}]
  %s7 = inlined_call_operand.hbm [shape: f32[1,256], index: 7, kind: output, shape index: {}]
  %s8 = sld [smem:[#allocation0]]
  $region61: #{tpu_custom_call.1} parent=0
    _
  %s10 = ssub.s32 1, %s8
  %s11 = scalar_select 0, %s10, %s8
  %v12 = vstv %s6
  %13 = vst [vmem:[#allocation2] sm:$0x1] %v12
  $region1: #{tpu_custom_call.1} parent=0
    #allocation3 [shape = 'u8[1024]{0}', space=vmem, size = 0x400, scoped, tag = 'output window, operand 0']
    #allocation4 [shape = 's32[2]{0}', space=sflag, size = 0x8, scoped, tag = 'scoped memory for tpu_custom_call.1']
    %14 = vsyncpa [#allocation4], 0
    %s15 = scalar_lea.sflag [#allocation4], 1
    %16 = vsyncpa %s15, 0
    loop: start=0, step=1, limit=4
    $region2: #{tpu_custom_call.1} parent=1 // loop_pre_header
      _
    $region3: #{tpu_custom_call.1} parent=1 // loop_header
      %s18 = sphi 0, %s22
      %p19 = scmp.ge.s32.totalorder %s18, 4
      %s28 = sphi 0, %s30
      %s31 = sphi 0, %s28
      %s32 = sphi 0, %s31
      %s48 = sphi 0, %s32
      %s52 = sphi 0, %s52
      %s54 = sphi 0, %s52
      %s55 = sphi 0, %s54
      %s69 = sphi 0, %s55
      %s73 = sphi 0, %s73
      %s75 = sphi 0, %s73
      %s76 = sphi 0, %s75
      %s90 = sphi 0, %s76
      %s94 = sphi 0, %s94
      %s96 = sphi 0, %s94
      %s97 = sphi 0, %s96
      %s111 = sphi 0, %s97
      %s115 = sphi 0, %s115
      %s117 = sphi 0, %s115
      %s118 = sphi 0, %s117
      %s132 = sphi 0, %s118
      %s136 = sphi 0, %s136
      %s138 = sphi 0, %s136
      %s139 = sphi 0, %s138
      %s153 = sphi 0, %s139
      %s157 = sphi 0, %s157
      %s159 = sphi 0, %s157
      %s160 = sphi 0, %s159
      %s174 = sphi 0, %s160
      %s180 = sphi 0, %s182
      %s183 = sphi 0, %s180
      %s184 = sphi 0, %s183
      %s200 = sphi 0, %s184
    $region4: #{tpu_custom_call.1} parent=1 // loop_header_branch
      %21 = sbr.rel (%p19) target = $region8
    $region5: #{tpu_custom_call.1} parent=1 // loop_body
      %s23 = ssub.s32 %s18, 1
      %s24 = ssub.s32 %s18, 2
      %s25 = sadd.s32 %s18, 1
      %s26 = ssub.s32 %s18, %s25
      %p27 = scmp.eq.s32.totalorder %s26, 0
      %s29 = sadd.s32 %s28, 1
      %s30 = scalar_select %p27, %s28, %s29
      %p33 = pneg %p27
      %p34 = scmp.eq.s32.totalorder %s18, 1
      %p35 = por %p33, %p34
      %p36 = scmp.ne.s32.totalorder %s28, %s31
      %p37 = scmp.eq.s32.totalorder %s18, 0
      %p38 = por %p36, %p37
      %p39 = scmp.ne.s32.totalorder %s28, %s31
      %p40 = scmp.eq.s32.totalorder %s23, 1
      %p41 = por %p39, %p40
      %p42 = scmp.ne.s32.totalorder %s31, %s32
      %p43 = scmp.eq.s32.totalorder %s23, 0
      %p44 = por %p42, %p43
      %p45 = scmp.ne.s32.totalorder %s31, %s32
      %p46 = scmp.eq.s32.totalorder %s24, 1
      %p47 = por %p45, %p46
      %p49 = scmp.ne.s32.totalorder %s32, %s48
      %p50 = scmp.eq.s32.totalorder %s24, 0
      %p51 = por %p49, %p50
      %s53 = sadd.s32 %s52, 1
      %p56 = scmp.eq.s32.totalorder %s18, 1
      %p57 = scmp.ne.s32.totalorder %s52, %s54
      %p58 = scmp.eq.s32.totalorder %s18, 0
      %p59 = por %p57, %p58
      %p60 = scmp.ne.s32.totalorder %s52, %s54
      %p61 = scmp.eq.s32.totalorder %s23, 1
      %p62 = por %p60, %p61
      %p63 = scmp.ne.s32.totalorder %s54, %s55
      %p64 = scmp.eq.s32.totalorder %s23, 0
      %p65 = por %p63, %p64
      %p66 = scmp.ne.s32.totalorder %s54, %s55
      %p67 = scmp.eq.s32.totalorder %s24, 1
      %p68 = por %p66, %p67
      %p70 = scmp.ne.s32.totalorder %s55, %s69
      %p71 = scmp.eq.s32.totalorder %s24, 0
      %p72 = por %p70, %p71
      %s74 = sadd.s32 %s73, 1
      %p77 = scmp.eq.s32.totalorder %s18, 1
      %p78 = scmp.ne.s32.totalorder %s73, %s75
      %p79 = scmp.eq.s32.totalorder %s18, 0
      %p80 = por %p78, %p79
      %p81 = scmp.ne.s32.totalorder %s73, %s75
      %p82 = scmp.eq.s32.totalorder %s23, 1
      %p83 = por %p81, %p82
      %p84 = scmp.ne.s32.totalorder %s75, %s76
      %p85 = scmp.eq.s32.totalorder %s23, 0
      %p86 = por %p84, %p85
      %p87 = scmp.ne.s32.totalorder %s75, %s76
      %p88 = scmp.eq.s32.totalorder %s24, 1
      %p89 = por %p87, %p88
      %p91 = scmp.ne.s32.totalorder %s76, %s90
      %p92 = scmp.eq.s32.totalorder %s24, 0
      %p93 = por %p91, %p92
      %s95 = sadd.s32 %s94, 1
      %p98 = scmp.eq.s32.totalorder %s18, 1
      %p99 = scmp.ne.s32.totalorder %s94, %s96
      %p100 = scmp.eq.s32.totalorder %s18, 0
      %p101 = por %p99, %p100
      %p102 = scmp.ne.s32.totalorder %s94, %s96
      %p103 = scmp.eq.s32.totalorder %s23, 1
      %p104 = por %p102, %p103
      %p105 = scmp.ne.s32.totalorder %s96, %s97
      %p106 = scmp.eq.s32.totalorder %s23, 0
      %p107 = por %p105, %p106
      %p108 = scmp.ne.s32.totalorder %s96, %s97
      %p109 = scmp.eq.s32.totalorder %s24, 1
      %p110 = por %p108, %p109
      %p112 = scmp.ne.s32.totalorder %s97, %s111
      %p113 = scmp.eq.s32.totalorder %s24, 0
      %p114 = por %p112, %p113
      %s116 = sadd.s32 %s115, 1
      %p119 = scmp.eq.s32.totalorder %s18, 1
      %p120 = scmp.ne.s32.totalorder %s115, %s117
      %p121 = scmp.eq.s32.totalorder %s18, 0
      %p122 = por %p120, %p121
      %p123 = scmp.ne.s32.totalorder %s115, %s117
      %p124 = scmp.eq.s32.totalorder %s23, 1
      %p125 = por %p123, %p124
      %p126 = scmp.ne.s32.totalorder %s117, %s118
      %p127 = scmp.eq.s32.totalorder %s23, 0
      %p128 = por %p126, %p127
      %p129 = scmp.ne.s32.totalorder %s117, %s118
      %p130 = scmp.eq.s32.totalorder %s24, 1
      %p131 = por %p129, %p130
      %p133 = scmp.ne.s32.totalorder %s118, %s132
      %p134 = scmp.eq.s32.totalorder %s24, 0
      %p135 = por %p133, %p134
      %s137 = sadd.s32 %s136, 1
      %p140 = scmp.eq.s32.totalorder %s18, 1
      %p141 = scmp.ne.s32.totalorder %s136, %s138
      %p142 = scmp.eq.s32.totalorder %s18, 0
      %p143 = por %p141, %p142
      %p144 = scmp.ne.s32.totalorder %s136, %s138
      %p145 = scmp.eq.s32.totalorder %s23, 1
      %p146 = por %p144, %p145
      %p147 = scmp.ne.s32.totalorder %s138, %s139
      %p148 = scmp.eq.s32.totalorder %s23, 0
      %p149 = por %p147, %p148
      %p150 = scmp.ne.s32.totalorder %s138, %s139
      %p151 = scmp.eq.s32.totalorder %s24, 1
      %p152 = por %p150, %p151
      %p154 = scmp.ne.s32.totalorder %s139, %s153
      %p155 = scmp.eq.s32.totalorder %s24, 0
      %p156 = por %p154, %p155
      %s158 = sadd.s32 %s157, 1
      %p161 = scmp.eq.s32.totalorder %s18, 1
      %p162 = scmp.ne.s32.totalorder %s157, %s159
      %p163 = scmp.eq.s32.totalorder %s18, 0
      %p164 = por %p162, %p163
      %p165 = scmp.ne.s32.totalorder %s157, %s159
      %p166 = scmp.eq.s32.totalorder %s23, 1
      %p167 = por %p165, %p166
      %p168 = scmp.ne.s32.totalorder %s159, %s160
      %p169 = scmp.eq.s32.totalorder %s23, 0
      %p170 = por %p168, %p169
      %p171 = scmp.ne.s32.totalorder %s159, %s160
      %p172 = scmp.eq.s32.totalorder %s24, 1
      %p173 = por %p171, %p172
      %p175 = scmp.ne.s32.totalorder %s160, %s174
      %p176 = scmp.eq.s32.totalorder %s24, 0
      %p177 = por %p175, %p176
      %s178 = ssub.s32 %s18, %s25
      %p179 = scmp.eq.s32.totalorder %s178, 0
      %s181 = sadd.s32 %s180, 1
      %s182 = scalar_select %p179, %s180, %s181
      %p185 = pneg %p179
      %p186 = scmp.eq.s32.totalorder %s18, 1
      %p187 = por %p185, %p186
      %p188 = scmp.ne.s32.totalorder %s180, %s183
      %p189 = scmp.eq.s32.totalorder %s18, 0
      %p190 = por %p188, %p189
      %p191 = scmp.ne.s32.totalorder %s180, %s183
      %p192 = scmp.eq.s32.totalorder %s23, 1
      %p193 = por %p191, %p192
      %p194 = scmp.ne.s32.totalorder %s183, %s184
      %p195 = scmp.eq.s32.totalorder %s23, 0
      %p196 = por %p194, %p195
      %p197 = scmp.ne.s32.totalorder %s183, %s184
      %p198 = scmp.eq.s32.totalorder %s24, 1
      %p199 = por %p197, %p198
      %p201 = scmp.ne.s32.totalorder %s184, %s200
      %p202 = scmp.eq.s32.totalorder %s24, 0
      %p203 = por %p201, %p202
      %p204 = scmp.le.s32.totalorder 1, %s18
      %p205 = scmp.lt.s32.totalorder %s18, 3
      %p206 = pnand %p204, %p205
      %p207 = pneg %p206
      // Predicated region
      $region9: #{tpu_custom_call.1} parent=5 // pred_check
        _
      $region10: #{tpu_custom_call.1} parent=5 // pred_check_branch
        %209 = sbr.rel (%p206) target = $region12
      $region11: #{tpu_custom_call.1} parent=5 // pred_region
        %s210 = ssub.s32 %s18, 1
        // Predicated region
        $region13: #{tpu_custom_call.1} parent=11 // pred_check
          %p211 = pneg %p65
        $region14: #{tpu_custom_call.1} parent=11 // pred_check_branch
          %213 = sbr.rel (%p211) target = $region16
        $region15: #{tpu_custom_call.1} parent=11 // pred_region
          _
        $region16: #{tpu_custom_call.1} parent=11 // pred_fallthru
          _
        // Predicated region
        $region17: #{tpu_custom_call.1} parent=11 // pred_check
          %p214 = pneg %p86
        $region18: #{tpu_custom_call.1} parent=11 // pred_check_branch
          %216 = sbr.rel (%p214) target = $region20
        $region19: #{tpu_custom_call.1} parent=11 // pred_region
          _
        $region20: #{tpu_custom_call.1} parent=11 // pred_fallthru
          _
        // Predicated region
        $region21: #{tpu_custom_call.1} parent=11 // pred_check
          %p217 = pneg %p107
        $region22: #{tpu_custom_call.1} parent=11 // pred_check_branch
          %219 = sbr.rel (%p217) target = $region24
        $region23: #{tpu_custom_call.1} parent=11 // pred_region
          _
        $region24: #{tpu_custom_call.1} parent=11 // pred_fallthru
          _
        // Predicated region
        $region25: #{tpu_custom_call.1} parent=11 // pred_check
          %p220 = pneg %p128
        $region26: #{tpu_custom_call.1} parent=11 // pred_check_branch
          %222 = sbr.rel (%p220) target = $region28
        $region27: #{tpu_custom_call.1} parent=11 // pred_region
          _
        $region28: #{tpu_custom_call.1} parent=11 // pred_fallthru
          _
        // Predicated region
        $region29: #{tpu_custom_call.1} parent=11 // pred_check
          %p223 = pneg %p149
        $region30: #{tpu_custom_call.1} parent=11 // pred_check_branch
          %225 = sbr.rel (%p223) target = $region32
        $region31: #{tpu_custom_call.1} parent=11 // pred_region
          _
        $region32: #{tpu_custom_call.1} parent=11 // pred_fallthru
          _
        // Predicated region
        $region33: #{tpu_custom_call.1} parent=11 // pred_check
          %p226 = pneg %p170
        $region34: #{tpu_custom_call.1} parent=11 // pred_check_branch
          %228 = sbr.rel (%p226) target = $region36
        $region35: #{tpu_custom_call.1} parent=11 // pred_region
          _
        $region36: #{tpu_custom_call.1} parent=11 // pred_fallthru
          _
      $region12: #{tpu_custom_call.1} parent=5 // pred_fallthru
        _
      %p229 = scmp.lt.s32.totalorder %s18, 2
      // Predicated region
      $region37: #{tpu_custom_call.1} parent=5 // pred_check
        %p230 = pneg %p229
      $region38: #{tpu_custom_call.1} parent=5 // pred_check_branch
        %232 = sbr.rel (%p230) target = $region40
      $region39: #{tpu_custom_call.1} parent=5 // pred_region
        // Predicated region
        $region41: #{tpu_custom_call.1} parent=39 // pred_check
          %p233 = pneg %p38
        $region42: #{tpu_custom_call.1} parent=39 // pred_check_branch
          %235 = sbr.rel (%p233) target = $region44
        $region43: #{tpu_custom_call.1} parent=39 // pred_region
          %p236 = scmp.lt.s32.totalorder %s18, 1
          %s237 = scalar_select %p236, %s18, 1
          %s238 = smul.addr %s237, 2
          %s239 = scalar_lea.vmem %s0, %s238
        $region44: #{tpu_custom_call.1} parent=39 // pred_fallthru
          _
      $region40: #{tpu_custom_call.1} parent=5 // pred_fallthru
        _
      %p240 = scmp.le.s32.totalorder 1, %s18
      %p241 = scmp.lt.s32.totalorder %s18, 3
      %p242 = pnand %p240, %p241
      %p243 = pneg %p242
      // Predicated region
      $region45: #{tpu_custom_call.1} parent=5 // pred_check
        _
      $region46: #{tpu_custom_call.1} parent=5 // pred_check_branch
        %245 = sbr.rel (%p242) target = $region48
      $region47: #{tpu_custom_call.1} parent=5 // pred_region
        %s246 = ssub.s32 %s18, 1
        %p247 = scmp.lt.s32.totalorder %s23, 1
        %s248 = scalar_select %p247, %s23, 1
        %s249 = smul.addr %s248, 2
        %s250 = scalar_lea.vmem %s0, %s249
        %p251 = pneg %p44
        %p252 = pneg %p41
        %p253 = pneg %p65
        %p254 = pneg %p62
        %p255 = pneg %p86
        %p256 = pneg %p83
        %p257 = pneg %p107
        %p258 = pneg %p104
        %p259 = pneg %p128
        %p260 = pneg %p125
        %p261 = pneg %p149
        %p262 = pneg %p146
        %p263 = pneg %p170
        %p264 = pneg %p167
        %p265 = pneg %p196
        %p266 = pneg %p193
        %s267 = sand.u32 %s183, 1
        %s268 = scalar_lea.sflag [#allocation4], %s267
        %s269 = sand.u32 %s183, 1
        %s270 = scalar_lea.vmem [#allocation3], %s269
        %p271 = scmp.lt.s32.totalorder %s23, 1
        %s272 = scalar_select %p271, %s23, 1
        %s273 = smul.addr %s272, 2
        %s274 = scalar_lea.vmem %s0, %s273
        %v275 = vld [vmem:[%s1] sm:$0xff]
        %v276 = vld [vmem:[%s1 + $0x8] sm:$0xff]
        %v277 = vld [vmem:[%s1 + $0x10] sm:$0xf]
        %v278 = vld [vmem:[%s3] sm:$0xff]
        %v279 = vld [vmem:[%s3 + $0x8] sm:$0xff]
        %v280 = vld [vmem:[%s3 + $0x10] sm:$0xf]
        %v281 = vld [vmem:[%s5] sm:$0x1]
        %v282 = vld [vmem:[%s2] sm:$0xff]
        %v283 = vld [vmem:[%s2 + $0x8] sm:$0xff]
        %v284 = vld [vmem:[%s2 + $0x10] sm:$0xf]
        %286 = vset.pattern.permute.xlu0 0
        %287 = vperm.xlu0 %286, %v282
        %v288 = vpop.permute.xlu0 %287
        %291 = vset.pattern.permute.xlu0 0
        %292 = vperm.xlu0 %291, %v283
        %v293 = vpop.permute.xlu0 %292
        %296 = vset.pattern.permute.xlu0 0
        %297 = vperm.xlu0 %296, %v284
        %v298 = vpop.permute.xlu0 %297
        %v300 = vld [vmem:[%s4] sm:$0xff]
        %v301 = vld [vmem:[%s4 + $0x8] sm:$0xff]
        %v302 = vld [vmem:[%s4 + $0x10] sm:$0xf]
        %304 = vset.pattern.permute.xlu0 0
        %305 = vperm.xlu0 %304, %v300
        %v306 = vpop.permute.xlu0 %305
        %309 = vset.pattern.permute.xlu0 0
        %310 = vperm.xlu0 %309, %v301
        %v311 = vpop.permute.xlu0 %310
        %314 = vset.pattern.permute.xlu0 0
        %315 = vperm.xlu0 %314, %v302
        %v316 = vpop.permute.xlu0 %315
        %v318 = vld [vmem:[#allocation2] sm:$0x1]
        %320 = vset.pattern.permute.xlu0 0
        %321 = vperm.xlu0 %320, %v318
        %v322 = vpop.permute.xlu0 %321
        %v324 = vperm.slane %v322, 0
        %v325 = vld [vmem:[%s274] sm:$0x3]
        %vm326 = vcmask 15360
        %v328 = vsel %vm326, %v275, 0
        %v331 = vsel %vm326, %v276, 0
        %v334 = vsel %vm326, %v277, 0
        %vm336 = vcmask 1041408
        %v338 = vsel %vm336, %v325, 0
        %340 = vmatpush.msra.mxu0 0.0
        %341 = vmatpush.msra.mxu0 0.0
        %342 = vmatpush.msra.mxu0 0.0
        %343 = vmatpush.msra.mxu0 0.0
        %344 = vmatpush.msra.mxu0 0.0
        %345 = vmatpush.msra.mxu0 0.0
        %346 = vmatpush.msra.mxu0 0.0
        %347 = vmatpush.msra.mxu0 0.0
        %348 = vmatpush.msra.mxu0 0.0
        %349 = vmatpush.msra.mxu0 0.0
        %350 = vmatpush.msra.mxu0 0.0
        %351 = vmatpush.msra.mxu0 0.0
        %352 = vmatpush.msra.mxu0 0.0
        %353 = vmatpush.msra.mxu0 0.0
        %354 = vmatpush.msra.mxu0 0.0
        %355 = vmatpush.msra.mxu0 %v338
        %356 = vmatmul.f32.gmra.mxu0 %v328
        %v357 = vpop.f32.mrf.mxu0
        %v358 = vadd.f32 %v288, %v357
        %359 = vmatmul.f32.gmra.mxu0 %v331
        %v360 = vpop.f32.mrf.mxu0
        %v361 = vadd.f32 %v293, %v360
        %362 = vmatmul.f32.gmra.mxu0 %v334
        %v363 = vpop.f32.mrf.mxu0
        %v364 = vadd.f32 %v298, %v363
        %365 = vdwg.mxu0
        %v366 = vtanh.pop %v358
        %v367 = vtanh.pop %v361
        %v368 = vtanh.pop %v364
        %vm369 = vcmask 162816
        %v371 = vsel %vm369, %v278, 0
        %v374 = vsel %vm369, %v279, 0
        %v377 = vsel %vm369, %v280, 0
        %vm379 = vcmask 1043456
        %v381 = vsel %vm379, %v368, 0
        %383 = vmatpush.msra.mxu0 0.0
        %384 = vmatpush.msra.mxu0 0.0
        %385 = vmatpush.msra.mxu0 0.0
        %386 = vmatpush.msra.mxu0 0.0
        %387 = vmatpush.msra.mxu0 0.0
        %388 = vmatpush.msra.mxu0 0.0
        %389 = vmatpush.msra.mxu0 0.0
        %390 = vmatpush.msra.mxu0 0.0
        %391 = vmatpush.msra.mxu0 0.0
        %392 = vmatpush.msra.mxu0 0.0
        %393 = vmatpush.msra.mxu0 0.0
        %394 = vmatpush.msra.mxu0 0.0
        %395 = vmatpush.msra.mxu0 0.0
        %396 = vmatpush.msra.mxu0 %v381
        %397 = vmatpush.msra.mxu0 %v367
        %398 = vmatpush.msra.mxu0 %v366
        %399 = vmatmul.f32.gmra.mxu0 %v371
        %v400 = vpop.f32.mrf.mxu0
        %v401 = vadd.f32 %v306, %v400
        %402 = vmatmul.f32.gmra.mxu0 %v374
        %v403 = vpop.f32.mrf.mxu0
        %v404 = vadd.f32 %v311, %v403
        %405 = vmatmul.f32.gmra.mxu0 %v377
        %v406 = vpop.f32.mrf.mxu0
        %v407 = vadd.f32 %v316, %v406
        %408 = vdwg.mxu0
        %v409 = vtanh.pop %v401
        %v410 = vtanh.pop %v404
        %v411 = vtanh.pop %v407
        %v413 = vsel %vm379, %v411, 0
        %415 = vmatpush.msra.mxu0 0.0
        %416 = vmatpush.msra.mxu0 0.0
        %417 = vmatpush.msra.mxu0 0.0
        %418 = vmatpush.msra.mxu0 0.0
        %419 = vmatpush.msra.mxu0 0.0
        %420 = vmatpush.msra.mxu0 0.0
        %421 = vmatpush.msra.mxu0 0.0
        %422 = vmatpush.msra.mxu0 0.0
        %423 = vmatpush.msra.mxu0 0.0
        %424 = vmatpush.msra.mxu0 0.0
        %425 = vmatpush.msra.mxu0 0.0
        %426 = vmatpush.msra.mxu0 0.0
        %427 = vmatpush.msra.mxu0 0.0
        %428 = vmatpush.msra.mxu0 %v413
        %429 = vmatpush.msra.mxu0 %v410
        %430 = vmatpush.msra.mxu0 %v409
        %431 = vmatmul.f32.gmra.mxu0 %v371
        %v432 = vpop.f32.mrf.mxu0
        %v433 = vadd.f32 %v306, %v432
        %434 = vmatmul.f32.gmra.mxu0 %v374
        %v435 = vpop.f32.mrf.mxu0
        %v436 = vadd.f32 %v311, %v435
        %437 = vmatmul.f32.gmra.mxu0 %v377
        %v438 = vpop.f32.mrf.mxu0
        %v439 = vadd.f32 %v316, %v438
        %440 = vdwg.mxu0
        %v441 = vtanh.pop %v433
        %v442 = vtanh.pop %v436
        %v443 = vtanh.pop %v439
        %v445 = vsel %vm379, %v443, 0
        %447 = vmatpush.msra.mxu0 0.0
        %448 = vmatpush.msra.mxu0 0.0
        %449 = vmatpush.msra.mxu0 0.0
        %450 = vmatpush.msra.mxu0 0.0
        %451 = vmatpush.msra.mxu0 0.0
        %452 = vmatpush.msra.mxu0 0.0
        %453 = vmatpush.msra.mxu0 0.0
        %454 = vmatpush.msra.mxu0 0.0
        %455 = vmatpush.msra.mxu0 0.0
        %456 = vmatpush.msra.mxu0 0.0
        %457 = vmatpush.msra.mxu0 0.0
        %458 = vmatpush.msra.mxu0 0.0
        %459 = vmatpush.msra.mxu0 0.0
        %460 = vmatpush.msra.mxu0 %v445
        %461 = vmatpush.msra.mxu0 %v442
        %462 = vmatpush.msra.mxu0 %v441
        %463 = vmatmul.f32.gmra.mxu0 %v371
        %v464 = vpop.f32.mrf.mxu0
        %v465 = vadd.f32 %v306, %v464
        %466 = vmatmul.f32.gmra.mxu0 %v374
        %v467 = vpop.f32.mrf.mxu0
        %v468 = vadd.f32 %v311, %v467
        %469 = vmatmul.f32.gmra.mxu0 %v377
        %v470 = vpop.f32.mrf.mxu0
        %v471 = vadd.f32 %v316, %v470
        %472 = vdwg.mxu0
        %v473 = vtanh.pop %v465
        %v474 = vtanh.pop %v468
        %v475 = vtanh.pop %v471
        %v477 = vsel %vm379, %v475, 0
        %479 = vmatpush.msra.mxu0 0.0
        %480 = vmatpush.msra.mxu0 0.0
        %481 = vmatpush.msra.mxu0 0.0
        %482 = vmatpush.msra.mxu0 0.0
        %483 = vmatpush.msra.mxu0 0.0
        %484 = vmatpush.msra.mxu0 0.0
        %485 = vmatpush.msra.mxu0 0.0
        %486 = vmatpush.msra.mxu0 0.0
        %487 = vmatpush.msra.mxu0 0.0
        %488 = vmatpush.msra.mxu0 0.0
        %489 = vmatpush.msra.mxu0 0.0
        %490 = vmatpush.msra.mxu0 0.0
        %491 = vmatpush.msra.mxu0 0.0
        %492 = vmatpush.msra.mxu0 %v477
        %493 = vmatpush.msra.mxu0 %v474
        %494 = vmatpush.msra.mxu0 %v473
        %495 = vmatmul.f32.gmra.mxu0 %v371
        %v496 = vpop.f32.mrf.mxu0
        %v497 = vadd.f32 %v306, %v496
        %498 = vmatmul.f32.gmra.mxu0 %v374
        %v499 = vpop.f32.mrf.mxu0
        %v500 = vadd.f32 %v311, %v499
        %501 = vmatmul.f32.gmra.mxu0 %v377
        %v502 = vpop.f32.mrf.mxu0
        %v503 = vadd.f32 %v316, %v502
        %504 = vdwg.mxu0
        %v505 = vtanh.pop %v497
        %v506 = vtanh.pop %v500
        %v507 = vtanh.pop %v503
        %v509 = vsel %vm369, %v281, 0
        %v512 = vsel %vm379, %v507, 0
        %514 = vmatpush.msra.mxu0 0.0
        %515 = vmatpush.msra.mxu0 0.0
        %516 = vmatpush.msra.mxu0 0.0
        %517 = vmatpush.msra.mxu0 0.0
        %518 = vmatpush.msra.mxu0 0.0
        %519 = vmatpush.msra.mxu0 0.0
        %520 = vmatpush.msra.mxu0 0.0
        %521 = vmatpush.msra.mxu0 0.0
        %522 = vmatpush.msra.mxu0 0.0
        %523 = vmatpush.msra.mxu0 0.0
        %524 = vmatpush.msra.mxu0 0.0
        %525 = vmatpush.msra.mxu0 0.0
        %526 = vmatpush.msra.mxu0 0.0
        %527 = vmatpush.msra.mxu0 %v512
        %528 = vmatpush.msra.mxu0 %v506
        %529 = vmatpush.msra.mxu0 %v505
        %530 = vmatmul.f32.gmra.mxu0 %v509
        %v531 = vpop.f32.mrf.mxu0
        %v532 = vadd.f32 %v324, %v531
        %533 = vdwg.mxu0
        %534 = vst [vmem:[%s270] sm:$0x1] %v532
        %s535 = sand.u32 %s183, 1
        %s536 = scalar_lea.sflag [#allocation4], %s535
        %s537 = sand.u32 %s183, 1
        %s538 = scalar_lea.vmem [#allocation3], %s537
        // Predicated region
        $region49: #{tpu_custom_call.1} parent=47 // pred_check
          %p539 = pneg %p193
        $region50: #{tpu_custom_call.1} parent=47 // pred_check_branch
          %541 = sbr.rel (%p539) target = $region52
        $region51: #{tpu_custom_call.1} parent=47 // pred_region
          %543 = vsyncadd %s536, 0
          %s544 = scalar_lea.hbm %s7, %s23
          %s546 = sshll.u32 %s538, 4
          %s547 = int_to_ptr.vmem [resolvable:$true] %s546
          %s548 = sshll.u32 %s544, 4
          %s549 = int_to_ptr.hbm [resolvable:$true] %s548
          %551 = dma.vmem_to_hbm [thread:$0]  %s547, 16, %s549, %s536
        $region52: #{tpu_custom_call.1} parent=47 // pred_fallthru
          _
      $region48: #{tpu_custom_call.1} parent=5 // pred_fallthru
        _
      %p552 = scmp.le.s32.totalorder 2, %s18
      // Predicated region
      $region53: #{tpu_custom_call.1} parent=5 // pred_check
        %p553 = pneg %p552
      $region54: #{tpu_custom_call.1} parent=5 // pred_check_branch
        %555 = sbr.rel (%p553) target = $region56
      $region55: #{tpu_custom_call.1} parent=5 // pred_region
        %s556 = ssub.s32 %s18, 2
        // Predicated region
        $region57: #{tpu_custom_call.1} parent=55 // pred_check
          %p557 = pneg %p199
        $region58: #{tpu_custom_call.1} parent=55 // pred_check_branch
          %559 = sbr.rel (%p557) target = $region60
        $region59: #{tpu_custom_call.1} parent=55 // pred_region
          %s560 = sand.u32 %s184, 1
          %s561 = scalar_lea.sflag [#allocation4], %s560
          %s562 = sand.u32 %s184, 1
          %s563 = scalar_lea.vmem [#allocation3], %s562
          %565 = dma.done %s561, 16
        $region60: #{tpu_custom_call.1} parent=55 // pred_fallthru
          _
      $region56: #{tpu_custom_call.1} parent=5 // pred_fallthru
        _
    $region6: #{tpu_custom_call.1} parent=1 // loop_footer
      %s22 = sadd.s32 1, %s18
    $region7: #{tpu_custom_call.1} parent=1 // loop_footer_branch
      %17 = sbr.rel target = $region3
    $region8: #{tpu_custom_call.1} parent=1 // loop_exit
      _
    %566 = vsyncpa [#allocation4], 1
    %s567 = scalar_lea.sflag [#allocation4], 1
    %568 = vsyncpa %s567, 1

</llo_original>
